<compile_context>
chip_gen: v5e
topology: v5e:2x2
jax: 0.10.0
libtpu: 0.0.40
codegen_flags: <defaults>
</compile_context>

<pallas_src>
import functools

import jax
import jax.numpy as jnp
from jax import lax
from jax.experimental import pallas as pl
from jax.experimental.pallas import tpu as pltpu

_LANE = 128  # vreg lane width


def _env_cls_kernel(x_ref, w1_ref, b1_ref, w2_ref, b2_ref, out_ref, *, c_dim):
    x = x_ref[...]

    # Layer 1: x @ W1^T + b1, ReLU.  Contract the transposed operand directly
    # on the MXU (W1 stays in its native (h_dim, in_dim) layout).
    h = lax.dot_general(
        x, w1_ref[...],
        dimension_numbers=(((1,), (1,)), ((), ())),
        preferred_element_type=jnp.float32,
    )
    h = jnp.maximum(h + b1_ref[...], 0.0)

    # Layer 2: h @ W2^T + b2, ReLU.  W2 stays in its native (c_dim, h_dim) layout.
    o = lax.dot_general(
        h, w2_ref[...],
        dimension_numbers=(((1,), (1,)), ((), ())),
        preferred_element_type=jnp.float32,
    )
    o = jnp.maximum(o + b2_ref[...], 0.0)

    # Lane-dense store: zero-pad the narrow c_dim axis up to the 128-lane
    # output block so the writeback is a full-width (unmasked) store.
    c_pad = out_ref.shape[-1]
    if c_pad > c_dim:
        pad = jnp.zeros((o.shape[0], c_pad - c_dim), dtype=o.dtype)
        o = jnp.concatenate([o, pad], axis=-1)
    out_ref[...] = o.astype(out_ref.dtype)


def environment_cls_forward(x, w1, b1, w2, b2, *, block_b=256):
    """x: (B, in_dim); w1: (h_dim, in_dim); b1: (h_dim,); w2: (c_dim, h_dim); b2: (c_dim,)."""
    B, in_dim = x.shape
    h_dim = w1.shape[0]
    c_dim = w2.shape[0]

    # Lane-dense output width (pad c_dim up to a multiple of 128).
    c_pad = pl.cdiv(c_dim, _LANE) * _LANE

    # Batch tiling: at most `block_b` rows per grid step, sublane-aligned.
    block_b = min(block_b, max(8, pl.cdiv(B, 8) * 8))
    b_pad = pl.cdiv(B, block_b) * block_b
    x_in = x if b_pad == B else jnp.pad(x, ((0, b_pad - B), (0, 0)))

    # Biases as (1, N) tiles for in-kernel broadcast (no weight copies needed).
    b1_2d = b1.reshape(1, h_dim)
    b2_2d = b2.reshape(1, c_dim)

    grid = (b_pad // block_b,)

    out_padded = pl.pallas_call(
        functools.partial(_env_cls_kernel, c_dim=c_dim),
        out_shape=jax.ShapeDtypeStruct((b_pad, c_pad), x.dtype),
        grid=grid,
        in_specs=[
            pl.BlockSpec((block_b, in_dim), lambda i: (i, 0)),   # x tile over batch
            pl.BlockSpec((h_dim, in_dim), lambda i: (0, 0)),     # W1 (native layout)
            pl.BlockSpec((1, h_dim), lambda i: (0, 0)),          # b1
            pl.BlockSpec((c_dim, h_dim), lambda i: (0, 0)),      # W2 (native layout)
            pl.BlockSpec((1, c_dim), lambda i: (0, 0)),          # b2
        ],
        out_specs=pl.BlockSpec((block_b, c_pad), lambda i: (i, 0)),
        compiler_params=pltpu.CompilerParams(
            dimension_semantics=("parallel",),
        ),
    )(x_in, w1, b1_2d, w2, b2_2d)

    return out_padded[:B, :c_dim]


if __name__ == "__main__":
    # Small shapes consistent with the module: batch=8, in_dim=32, h_dim=64, c_dim=16
    B, in_dim, h_dim, c_dim = 8, 32, 64, 16

    key = jax.random.PRNGKey(0)
    kx, kw1, kb1, kw2, kb2 = jax.random.split(key, 5)

    x = jax.random.normal(kx, (B, in_dim), dtype=jnp.float32)
    # Deterministic synthetic parameters (shapes match nn.Linear(in,h) / nn.Linear(h,c))
    w1 = jax.random.uniform(kw1, (h_dim, in_dim), dtype=jnp.float32, minval=-0.1, maxval=0.1)
    b1 = jax.random.uniform(kb1, (h_dim,), dtype=jnp.float32, minval=-0.1, maxval=0.1)
    w2 = jax.random.uniform(kw2, (c_dim, h_dim), dtype=jnp.float32, minval=-0.1, maxval=0.1)
    b2 = jax.random.uniform(kb2, (c_dim,), dtype=jnp.float32, minval=-0.1, maxval=0.1)

    out = environment_cls_forward(x, w1, b1, w2, b2)
    jax.block_until_ready(out)

    # Reference check in plain JAX (same semantics as the PyTorch forward).
    ref = jnp.maximum(jnp.maximum(x @ w1.T + b1, 0.0) @ w2.T + b2, 0.0)
    assert out.shape == (B, c_dim)
    assert jnp.allclose(out, ref, atol=1e-5, rtol=1e-5)

    print("KERNEL_OK")
</pallas_src>

<mosaic_0001>
module attributes {stable_mosaic.version = 11 : i64} {
  func.func @_env_cls_kernel(%arg0: i32, %arg1: memref<8x32xf32, #tpu.memory_space<vmem>>, %arg2: memref<64x32xf32, #tpu.memory_space<vmem>>, %arg3: memref<1x64xf32, #tpu.memory_space<vmem>>, %arg4: memref<16x64xf32, #tpu.memory_space<vmem>>, %arg5: memref<1x16xf32, #tpu.memory_space<vmem>>, %arg6: memref<8x128xf32, #tpu.memory_space<vmem>>) attributes {dimension_semantics = [#tpu.dimension_semantics<parallel>], iteration_bounds = array<i64: 1>, scalar_prefetch = 0 : i64, scratch_operands = 0 : i64, tpu.core_type = #tpu.core_type<tc>, window_params = [{transform_indices = @transform_0, window_bounds = array<i64: 8, 32>}, {pipeline_mode = #tpu.pipeline_mode<synchronous>, transform_indices = @transform_1, window_bounds = array<i64: 64, 32>}, {pipeline_mode = #tpu.pipeline_mode<synchronous>, transform_indices = @transform_2, window_bounds = array<i64: 1, 64>}, {pipeline_mode = #tpu.pipeline_mode<synchronous>, transform_indices = @transform_3, window_bounds = array<i64: 16, 64>}, {pipeline_mode = #tpu.pipeline_mode<synchronous>, transform_indices = @transform_4, window_bounds = array<i64: 1, 16>}, {transform_indices = @transform_5, window_bounds = array<i64: 8, 128>}]} {
    %c0 = arith.constant 0 : index
    %c0_0 = arith.constant 0 : index
    %0 = vector.load %arg1[%c0, %c0_0] : memref<8x32xf32, #tpu.memory_space<vmem>>, vector<8x32xf32>
    %c0_1 = arith.constant 0 : index
    %c0_2 = arith.constant 0 : index
    %1 = vector.load %arg2[%c0_1, %c0_2] : memref<64x32xf32, #tpu.memory_space<vmem>>, vector<64x32xf32>
    %cst = arith.constant dense<0.000000e+00> : vector<8x64xf32>
    %2 = tpu.matmul %0, %1, %cst {dimension_numbers = #tpu.dot_dimension_numbers<[1], [1], [0], [0], [0, 0, 1, 0], [], []>} : vector<8x32xf32>, vector<64x32xf32>, vector<8x64xf32> -> vector<8x64xf32>
    %c0_3 = arith.constant 0 : index
    %c0_4 = arith.constant 0 : index
    %3 = vector.load %arg3[%c0_3, %c0_4] : memref<1x64xf32, #tpu.memory_space<vmem>>, vector<1x64xf32>
    %4 = vector.broadcast %3 : vector<1x64xf32> to vector<8x64xf32>
    %5 = arith.addf %2, %4 : vector<8x64xf32>
    %cst_5 = arith.constant 0.000000e+00 : f32
    %6 = vector.broadcast %cst_5 : f32 to vector<8x64xf32>
    %7 = arith.maximumf %5, %6 : vector<8x64xf32>
    %c0_6 = arith.constant 0 : index
    %c0_7 = arith.constant 0 : index
    %8 = vector.load %arg4[%c0_6, %c0_7] : memref<16x64xf32, #tpu.memory_space<vmem>>, vector<16x64xf32>
    %cst_8 = arith.constant dense<0.000000e+00> : vector<8x16xf32>
    %9 = tpu.matmul %7, %8, %cst_8 {dimension_numbers = #tpu.dot_dimension_numbers<[1], [1], [0], [0], [0, 0, 1, 0], [], []>} : vector<8x64xf32>, vector<16x64xf32>, vector<8x16xf32> -> vector<8x16xf32>
    %c0_9 = arith.constant 0 : index
    %c0_10 = arith.constant 0 : index
    %10 = vector.load %arg5[%c0_9, %c0_10] : memref<1x16xf32, #tpu.memory_space<vmem>>, vector<1x16xf32>
    %11 = vector.broadcast %10 : vector<1x16xf32> to vector<8x16xf32>
    %12 = arith.addf %9, %11 : vector<8x16xf32>
    %cst_11 = arith.constant 0.000000e+00 : f32
    %13 = vector.broadcast %cst_11 : f32 to vector<8x16xf32>
    %14 = arith.maximumf %12, %13 : vector<8x16xf32>
    %cst_12 = arith.constant 0.000000e+00 : f32
    %15 = vector.broadcast %cst_12 : f32 to vector<8x112xf32>
    %16 = tpu.concatenate %14, %15 in 1 : vector<8x16xf32>, vector<8x112xf32> -> vector<8x128xf32>
    %c0_13 = arith.constant 0 : index
    %c0_14 = arith.constant 0 : index
    %17 = vector.load %arg6[%c0_13, %c0_14] : memref<8x128xf32, #tpu.memory_space<vmem>>, vector<8x128xf32>
    tpu.vector_store %arg6[%c0_13, %c0_14], %16 {strides = array<i32>} : memref<8x128xf32, #tpu.memory_space<vmem>>, vector<8x128xf32>,
    return
  }
  func.func @transform_0(%arg0: i32) -> (i32, i32) {
    %c0_i32 = arith.constant 0 : i32
    %c0_i32_0 = arith.constant 0 : i32
    return %arg0, %c0_i32 : i32, i32
  }
  func.func @transform_1(%arg0: i32) -> (i32, i32) {
    %c0_i32 = arith.constant 0 : i32
    %c0_i32_0 = arith.constant 0 : i32
    %c0_i32_1 = arith.constant 0 : i32
    return %c0_i32, %c0_i32_0 : i32, i32
  }
  func.func @transform_2(%arg0: i32) -> (i32, i32) {
    %c0_i32 = arith.constant 0 : i32
    %c0_i32_0 = arith.constant 0 : i32
    %c0_i32_1 = arith.constant 0 : i32
    return %c0_i32, %c0_i32_0 : i32, i32
  }
  func.func @transform_3(%arg0: i32) -> (i32, i32) {
    %c0_i32 = arith.constant 0 : i32
    %c0_i32_0 = arith.constant 0 : i32
    %c0_i32_1 = arith.constant 0 : i32
    return %c0_i32, %c0_i32_0 : i32, i32
  }
  func.func @transform_4(%arg0: i32) -> (i32, i32) {
    %c0_i32 = arith.constant 0 : i32
    %c0_i32_0 = arith.constant 0 : i32
    %c0_i32_1 = arith.constant 0 : i32
    return %c0_i32, %c0_i32_0 : i32, i32
  }
  func.func @transform_5(%arg0: i32) -> (i32, i32) {
    %c0_i32 = arith.constant 0 : i32
    %c0_i32_0 = arith.constant 0 : i32
    return %arg0, %c0_i32 : i32, i32
  }
}

</mosaic_0001>

<llo_original>
// kernel: tpu_custom_call.1
$region0: #{tpu_custom_call.1}
  #allocation0 [shape = 'u32[]', space=smem, size = 0x4, offset = 0x4, fixed_abs, tag = 'smem constant byte address 0x4 - core index']
  #allocation1 [shape = 'u32[72,128]{1,0:T(1,128)}', space=vmem, size = 0x9000, scoped, tag = 'internal scratch']
  %s0 = inlined_call_operand.vmem [shape: f32[8,32], index: 0, kind: input, shape index: {}]
  %s1 = inlined_call_operand.vmem [shape: f32[64,32], index: 1, kind: input, shape index: {}]
  %s2 = inlined_call_operand.vmem [shape: f32[1,64], index: 2, kind: input, shape index: {}]
  %s3 = inlined_call_operand.vmem [shape: f32[16,64], index: 3, kind: input, shape index: {}]
  %s4 = inlined_call_operand.vmem [shape: f32[1,16], index: 4, kind: input, shape index: {}]
  %s5 = inlined_call_operand.hbm [shape: f32[8,128], index: 5, kind: output, shape index: {}]
  %s6 = sld [smem:[#allocation0]]
  $region30: #{tpu_custom_call.1} parent=0
    _
  %s8 = ssub.s32 1, %s6
  %s9 = scalar_select 0, %s8, %s6
  $region1: #{tpu_custom_call.1} parent=0
    #allocation2 [shape = 'u8[4096]{0}', space=vmem, size = 0x1000, scoped, tag = 'output window, operand 0, single buffered']
    #allocation3 [shape = 's32[1]{0}', space=sflag, size = 0x4, scoped, tag = 'scoped memory for tpu_custom_call.1']
    %10 = vsyncpa [#allocation3], 0
    // Predicated region
    $region2: #{tpu_custom_call.1} parent=1 // pred_check
      _
    $region3: #{tpu_custom_call.1} parent=1 // pred_check_branch
      %12 = sbr.rel (0) target = $region5
    $region4: #{tpu_custom_call.1} parent=1 // pred_region
      _
    $region5: #{tpu_custom_call.1} parent=1 // pred_fallthru
      _
    // Predicated region
    $region6: #{tpu_custom_call.1} parent=1 // pred_check
      _
    $region7: #{tpu_custom_call.1} parent=1 // pred_check_branch
      %14 = sbr.rel (0) target = $region9
    $region8: #{tpu_custom_call.1} parent=1 // pred_region
      _
    $region9: #{tpu_custom_call.1} parent=1 // pred_fallthru
      _
    // Predicated region
    $region10: #{tpu_custom_call.1} parent=1 // pred_check
      _
    $region11: #{tpu_custom_call.1} parent=1 // pred_check_branch
      %16 = sbr.rel (0) target = $region13
    $region12: #{tpu_custom_call.1} parent=1 // pred_region
      _
    $region13: #{tpu_custom_call.1} parent=1 // pred_fallthru
      _
    // Predicated region
    $region14: #{tpu_custom_call.1} parent=1 // pred_check
      _
    $region15: #{tpu_custom_call.1} parent=1 // pred_check_branch
      %18 = sbr.rel (0) target = $region17
    $region16: #{tpu_custom_call.1} parent=1 // pred_region
      _
    $region17: #{tpu_custom_call.1} parent=1 // pred_fallthru
      _
    // Predicated region
    $region18: #{tpu_custom_call.1} parent=1 // pred_check
      _
    $region19: #{tpu_custom_call.1} parent=1 // pred_check_branch
      %20 = sbr.rel (0) target = $region21
    $region20: #{tpu_custom_call.1} parent=1 // pred_region
      _
    $region21: #{tpu_custom_call.1} parent=1 // pred_fallthru
      _
    %v21 = vld [vmem:[%s0] sm:$0xff]
    %v22 = vld [vmem:[%s1] sm:$0xff]
    %v23 = vld [vmem:[%s1 + $0x8] sm:$0xff]
    %v24 = vld [vmem:[%s1 + $0x10] sm:$0xff]
    %v25 = vld [vmem:[%s1 + $0x18] sm:$0xff]
    %v26 = vld [vmem:[%s1 + $0x20] sm:$0xff]
    %v27 = vld [vmem:[%s1 + $0x28] sm:$0xff]
    %v28 = vld [vmem:[%s1 + $0x30] sm:$0xff]
    %v29 = vld [vmem:[%s1 + $0x38] sm:$0xff]
    %v30 = vld [vmem:[%s2] sm:$0x1]
    %v32 = vperm.slane %v30, 0
    %vm34 = vcmask 261120
    %v36 = vsel %vm34, %v21, 0
    %v39 = vsel %vm34, %v22, 0
    %v42 = vsel %vm34, %v23, 0
    %v45 = vsel %vm34, %v24, 0
    %v48 = vsel %vm34, %v25, 0
    %v51 = vsel %vm34, %v26, 0
    %v54 = vsel %vm34, %v27, 0
    %v57 = vsel %vm34, %v28, 0
    %v60 = vsel %vm34, %v29, 0
    %62 = vmatpush.xpose.msra.mxu0 0.0
    %63 = vmatpush.xpose.msra.mxu0 0.0
    %64 = vmatpush.xpose.msra.mxu0 0.0
    %65 = vmatpush.xpose.msra.mxu0 0.0
    %66 = vmatpush.xpose.msra.mxu0 0.0
    %67 = vmatpush.xpose.msra.mxu0 0.0
    %68 = vmatpush.xpose.msra.mxu0 0.0
    %69 = vmatpush.xpose.msra.mxu0 0.0
    %70 = vmatpush.xpose.msra.mxu0 %v60
    %71 = vmatpush.xpose.msra.mxu0 %v57
    %72 = vmatpush.xpose.msra.mxu0 %v54
    %73 = vmatpush.xpose.msra.mxu0 %v51
    %74 = vmatpush.xpose.msra.mxu0 %v48
    %75 = vmatpush.xpose.msra.mxu0 %v45
    %76 = vmatpush.xpose.msra.mxu0 %v42
    %77 = vmatpush.xpose.msra.mxu0 %v39
    %78 = vmatmul.f32.gmra.mxu0 %v36
    %v79 = vpop.f32.mrf.mxu0
    %v80 = vadd.f32 %v32, %v79
    %81 = vdwg.mxu0
    %v82 = vmax.f32 %v80, 0.0
    %v83 = vld [vmem:[%s3] sm:$0xff]
    %v84 = vld [vmem:[%s3 + $0x8] sm:$0xff]
    %v85 = vld [vmem:[%s4] sm:$0x1]
    %v87 = vperm.slane %v85, 0
    %vm89 = vcmask 523264
    %v91 = vsel %vm89, %v82, 0
    %v94 = vsel %vm89, %v83, 0
    %v97 = vsel %vm89, %v84, 0
    %99 = vmatpush.xpose.msra.mxu0 0.0
    %100 = vmatpush.xpose.msra.mxu0 0.0
    %101 = vmatpush.xpose.msra.mxu0 0.0
    %102 = vmatpush.xpose.msra.mxu0 0.0
    %103 = vmatpush.xpose.msra.mxu0 0.0
    %104 = vmatpush.xpose.msra.mxu0 0.0
    %105 = vmatpush.xpose.msra.mxu0 0.0
    %106 = vmatpush.xpose.msra.mxu0 0.0
    %107 = vmatpush.xpose.msra.mxu0 0.0
    %108 = vmatpush.xpose.msra.mxu0 0.0
    %109 = vmatpush.xpose.msra.mxu0 0.0
    %110 = vmatpush.xpose.msra.mxu0 0.0
    %111 = vmatpush.xpose.msra.mxu0 0.0
    %112 = vmatpush.xpose.msra.mxu0 0.0
    %113 = vmatpush.xpose.msra.mxu0 %v97
    %114 = vmatpush.xpose.msra.mxu0 %v94
    %115 = vmatmul.f32.gmra.mxu0 %v91
    %v116 = vpop.f32.mrf.mxu0
    %v117 = vadd.f32 %v87, %v116
    %118 = vdwg.mxu0
    %v119 = vmax.f32 %v117, 0.0
    %vm120 = vcmask 130048
    %v121 = vsel %vm120, %v119, 0.0
    %122 = vst [vmem:[#allocation2] sm:$0xff] %v121
    // Predicated region
    $region22: #{tpu_custom_call.1} parent=1 // pred_check
      _
    $region23: #{tpu_custom_call.1} parent=1 // pred_check_branch
      %124 = sbr.rel (0) target = $region25
    $region24: #{tpu_custom_call.1} parent=1 // pred_region
      %126 = vsyncadd [#allocation3], 0
      %s128 = sshll.u32 [#allocation2], 4
      %s129 = int_to_ptr.vmem [resolvable:$true] %s128
      %s130 = sshll.u32 %s5, 4
      %s131 = int_to_ptr.hbm [resolvable:$true] %s130
      %133 = dma.vmem_to_hbm [thread:$0]  %s129, 128, %s131, [#allocation3]
    $region25: #{tpu_custom_call.1} parent=1 // pred_fallthru
      _
    // Predicated region
    $region26: #{tpu_custom_call.1} parent=1 // pred_check
      _
    $region27: #{tpu_custom_call.1} parent=1 // pred_check_branch
      %135 = sbr.rel (0) target = $region29
    $region28: #{tpu_custom_call.1} parent=1 // pred_region
      %137 = dma.done [#allocation3], 128
    $region29: #{tpu_custom_call.1} parent=1 // pred_fallthru
      _
    %138 = vsyncpa [#allocation3], 1

</llo_original>
